<compile_context>
chip_gen: v7x
topology: tpu7x:2x2x1
jax: 0.10.0
libtpu: 0.0.40
codegen_flags: <defaults>
</compile_context>

<pallas_src>
import jax
import jax.numpy as jnp
from jax.experimental import pallas as pl
from jax.experimental.pallas import tpu as pltpu

K_IN = 28 * 28       # 784 (flattened 1x28x28)
H = 128              # hidden width (lane-aligned)
N_OUT = 10
N_PAD = 128          # lane-dense logits width (unmasked 128-lane stores)
TB_MAX = 2048        # max batch-tile rows (~6.4 MiB f32 x-tile, x2 buffers)
ROW_ALIGN = 16       # bf16 sublane packing
TARGET_STEPS = 4     # keep >=2 steps per TensorCore on v7x when batch allows


def _round_up(x, m):
    return (x + m - 1) // m * m


def mlp_kernel(x_ref, w1_ref, b1_ref, w2_ref, b2_ref, o_ref):
    # x:  (tb, 784) f32/bf16   w1: (784, 128) bf16   b1: (1, 128) f32
    # w2: (128, 128) bf16      b2: (1, 128)   f32    o:  (tb, 128) bf16
    x = x_ref[...].astype(jnp.bfloat16)        # in-VMEM cast (VPU, hidden under DMA)
    h = jnp.dot(x, w1_ref[...], preferred_element_type=jnp.float32)
    h = jnp.maximum(h + b1_ref[...], 0.0)      # bias + ReLU in f32
    out = jnp.dot(h.astype(jnp.bfloat16), w2_ref[...],
                  preferred_element_type=jnp.float32)
    o_ref[...] = (out + b2_ref[...]).astype(o_ref.dtype)


def prepare_params(w1, b1, w2, b2):
    """One-time parameter prep (cast/pad). Do NOT re-run per forward call."""
    w1_p = w1.astype(jnp.bfloat16)                                    # (784, 128)
    b1_p = b1.reshape(1, H).astype(jnp.float32)                       # (1, 128)
    w2_p = jnp.zeros((H, N_PAD), jnp.bfloat16).at[:, :N_OUT].set(
        w2.astype(jnp.bfloat16))                                      # (128, 128)
    b2_p = jnp.zeros((1, N_PAD), jnp.float32).at[0, :N_OUT].set(
        b2.astype(jnp.float32))                                       # (1, 128)
    return w1_p, b1_p, w2_p, b2_p


def simple_nn_forward(x_nchw, w1_p, b1_p, w2_p, b2_p):
    """x_nchw: (B, 1, 28, 28) -> logits (B, 10) float32."""
    B = x_nchw.shape[0]
    x_flat = x_nchw.reshape(B, K_IN)   # nn.Flatten(); read once, cast in-kernel

    # Batch tile: big enough to amortize per-step overhead, small enough to
    # leave >= TARGET_STEPS grid steps so both v7x TensorCores get work.
    tb = min(TB_MAX,
             _round_up(max(pl.cdiv(B, TARGET_STEPS), ROW_ALIGN), ROW_ALIGN))
    b_pad = _round_up(B, tb)
    if b_pad != B:
        # Tail padding only when B % tb != 0 (zero rows; sliced off below).
        x_in = jnp.zeros((b_pad, K_IN), x_flat.dtype).at[:B].set(x_flat)
    else:
        x_in = x_flat

    grid = (b_pad // tb,)
    x_bytes = x_in.size * x_in.dtype.itemsize
    w_bytes = (w1_p.size + w2_p.size) * 2 + (b1_p.size + b2_p.size) * 4
    out_bytes = b_pad * N_PAD * 2
    flops = 2 * b_pad * K_IN * H + 2 * b_pad * H * N_PAD

    out = pl.pallas_call(
        mlp_kernel,
        out_shape=jax.ShapeDtypeStruct((b_pad, N_PAD), jnp.bfloat16),
        grid=grid,
        in_specs=[
            # x: one (tb, 784) tile per grid step -> double-buffered by Pallas.
            pl.BlockSpec((tb, K_IN), lambda i: (i, 0)),
            # Weights/biases: constant index_map -> pinned in VMEM across steps.
            pl.BlockSpec((K_IN, H), lambda i: (0, 0)),
            pl.BlockSpec((1, H), lambda i: (0, 0)),
            pl.BlockSpec((H, N_PAD), lambda i: (0, 0)),
            pl.BlockSpec((1, N_PAD), lambda i: (0, 0)),
        ],
        out_specs=pl.BlockSpec((tb, N_PAD), lambda i: (i, 0)),
        compiler_params=pltpu.CompilerParams(
            dimension_semantics=("parallel",),    # megacore sharding on v7x
            vmem_limit_bytes=32 * 1024 * 1024,    # raise v5e's 16 MiB default
        ),
        cost_estimate=pl.CostEstimate(
            flops=flops, transcendentals=0,
            bytes_accessed=x_bytes + w_bytes + out_bytes),
    )(x_in, w1_p, b1_p, w2_p, b2_p)

    # Padded rows/lanes are bias-only garbage; never consume the raw tile.
    return out[:B, :N_OUT].astype(jnp.float32)


def init_params(key):
    """Deterministic init mimicking PyTorch nn.Linear default U[-1/sqrt(fan_in), +]."""
    k1, k2, k3, k4 = jax.random.split(key, 4)
    bound1 = 1.0 / jnp.sqrt(K_IN)
    w1 = jax.random.uniform(k1, (K_IN, H), jnp.float32, -bound1, bound1)
    b1 = jax.random.uniform(k2, (H,), jnp.float32, -bound1, bound1)
    bound2 = 1.0 / jnp.sqrt(H)
    w2 = jax.random.uniform(k3, (H, N_OUT), jnp.float32, -bound2, bound2)
    b2 = jax.random.uniform(k4, (N_OUT,), jnp.float32, -bound2, bound2)
    return w1, b1, w2, b2


if __name__ == "__main__":
    key = jax.random.PRNGKey(0)
    k_x, k_p = jax.random.split(key)

    B = 2
    x = jax.random.normal(k_x, (B, 1, 28, 28), jnp.float32)  # NCHW like PyTorch
    w1, b1, w2, b2 = init_params(k_p)

    # One-time param prep, then the streaming forward.
    params = prepare_params(w1, b1, w2, b2)
    fwd = jax.jit(simple_nn_forward)
    out = fwd(x, *params)
    out = jax.block_until_ready(out)

    # Pure-JAX f32 reference (tolerance loosened for bf16 matmuls + bf16 store).
    x_flat = x.reshape(B, -1)
    ref = jnp.maximum(x_flat @ w1 + b1, 0.0) @ w2 + b2
    assert out.shape == (B, 10)
    assert jnp.allclose(out, ref, atol=3e-2, rtol=3e-2), (
        f"max abs err {jnp.max(jnp.abs(out - ref))}")

    print("KERNEL_OK")
</pallas_src>

<mosaic_0001>
module attributes {stable_mosaic.version = 11 : i64} {
  func.func @mlp_kernel(%arg0: i32, %arg1: memref<16x784xf32, #tpu.memory_space<vmem>>, %arg2: memref<784x128xbf16, #tpu.memory_space<vmem>>, %arg3: memref<1x128xf32, #tpu.memory_space<vmem>>, %arg4: memref<128x128xbf16, #tpu.memory_space<vmem>>, %arg5: memref<1x128xf32, #tpu.memory_space<vmem>>, %arg6: memref<16x128xbf16, #tpu.memory_space<vmem>>) attributes {dimension_semantics = [#tpu.dimension_semantics<parallel>], iteration_bounds = array<i64: 1>, scalar_prefetch = 0 : i64, scratch_operands = 0 : i64, tpu.core_type = #tpu.core_type<tc>, window_params = [{transform_indices = @transform_0, window_bounds = array<i64: 16, 784>}, {pipeline_mode = #tpu.pipeline_mode<synchronous>, transform_indices = @transform_1, window_bounds = array<i64: 784, 128>}, {pipeline_mode = #tpu.pipeline_mode<synchronous>, transform_indices = @transform_2, window_bounds = array<i64: 1, 128>}, {pipeline_mode = #tpu.pipeline_mode<synchronous>, transform_indices = @transform_3, window_bounds = array<i64: 128, 128>}, {pipeline_mode = #tpu.pipeline_mode<synchronous>, transform_indices = @transform_4, window_bounds = array<i64: 1, 128>}, {transform_indices = @transform_5, window_bounds = array<i64: 16, 128>}]} {
    %c0 = arith.constant 0 : index
    %c0_0 = arith.constant 0 : index
    %0 = vector.load %arg1[%c0, %c0_0] : memref<16x784xf32, #tpu.memory_space<vmem>>, vector<16x784xf32>
    %1 = arith.truncf %0 : vector<16x784xf32> to vector<16x784xbf16>
    %c0_1 = arith.constant 0 : index
    %c0_2 = arith.constant 0 : index
    %2 = vector.load %arg2[%c0_1, %c0_2] : memref<784x128xbf16, #tpu.memory_space<vmem>>, vector<784x128xbf16>
    %cst = arith.constant dense<0.000000e+00> : vector<16x128xf32>
    %3 = tpu.matmul %1, %2, %cst {dimension_numbers = #tpu.dot_dimension_numbers<[1], [0], [0], [1], [0, 0, 1, 1], [], []>} : vector<16x784xbf16>, vector<784x128xbf16>, vector<16x128xf32> -> vector<16x128xf32>
    %c0_3 = arith.constant 0 : index
    %c0_4 = arith.constant 0 : index
    %4 = vector.load %arg3[%c0_3, %c0_4] : memref<1x128xf32, #tpu.memory_space<vmem>>, vector<1x128xf32>
    %5 = vector.broadcast %4 : vector<1x128xf32> to vector<16x128xf32>
    %6 = arith.addf %3, %5 : vector<16x128xf32>
    %cst_5 = arith.constant 0.000000e+00 : f32
    %7 = vector.broadcast %cst_5 : f32 to vector<16x128xf32>
    %8 = arith.maximumf %6, %7 : vector<16x128xf32>
    %9 = arith.truncf %8 : vector<16x128xf32> to vector<16x128xbf16>
    %c0_6 = arith.constant 0 : index
    %c0_7 = arith.constant 0 : index
    %10 = vector.load %arg4[%c0_6, %c0_7] : memref<128x128xbf16, #tpu.memory_space<vmem>>, vector<128x128xbf16>
    %cst_8 = arith.constant dense<0.000000e+00> : vector<16x128xf32>
    %11 = tpu.matmul %9, %10, %cst_8 {dimension_numbers = #tpu.dot_dimension_numbers<[1], [0], [0], [1], [0, 0, 1, 1], [], []>} : vector<16x128xbf16>, vector<128x128xbf16>, vector<16x128xf32> -> vector<16x128xf32>
    %c0_9 = arith.constant 0 : index
    %c0_10 = arith.constant 0 : index
    %12 = vector.load %arg5[%c0_9, %c0_10] : memref<1x128xf32, #tpu.memory_space<vmem>>, vector<1x128xf32>
    %13 = vector.broadcast %12 : vector<1x128xf32> to vector<16x128xf32>
    %14 = arith.addf %11, %13 : vector<16x128xf32>
    %15 = arith.truncf %14 : vector<16x128xf32> to vector<16x128xbf16>
    %c0_11 = arith.constant 0 : index
    %c0_12 = arith.constant 0 : index
    %16 = vector.load %arg6[%c0_11, %c0_12] : memref<16x128xbf16, #tpu.memory_space<vmem>>, vector<16x128xbf16>
    tpu.vector_store %arg6[%c0_11, %c0_12], %15 {strides = array<i32>} : memref<16x128xbf16, #tpu.memory_space<vmem>>, vector<16x128xbf16>,
    return
  }
  func.func @transform_0(%arg0: i32) -> (i32, i32) {
    %c0_i32 = arith.constant 0 : i32
    %c0_i32_0 = arith.constant 0 : i32
    return %arg0, %c0_i32 : i32, i32
  }
  func.func @transform_1(%arg0: i32) -> (i32, i32) {
    %c0_i32 = arith.constant 0 : i32
    %c0_i32_0 = arith.constant 0 : i32
    %c0_i32_1 = arith.constant 0 : i32
    return %c0_i32, %c0_i32_0 : i32, i32
  }
  func.func @transform_2(%arg0: i32) -> (i32, i32) {
    %c0_i32 = arith.constant 0 : i32
    %c0_i32_0 = arith.constant 0 : i32
    %c0_i32_1 = arith.constant 0 : i32
    return %c0_i32, %c0_i32_0 : i32, i32
  }
  func.func @transform_3(%arg0: i32) -> (i32, i32) {
    %c0_i32 = arith.constant 0 : i32
    %c0_i32_0 = arith.constant 0 : i32
    %c0_i32_1 = arith.constant 0 : i32
    return %c0_i32, %c0_i32_0 : i32, i32
  }
  func.func @transform_4(%arg0: i32) -> (i32, i32) {
    %c0_i32 = arith.constant 0 : i32
    %c0_i32_0 = arith.constant 0 : i32
    %c0_i32_1 = arith.constant 0 : i32
    return %c0_i32, %c0_i32_0 : i32, i32
  }
  func.func @transform_5(%arg0: i32) -> (i32, i32) {
    %c0_i32 = arith.constant 0 : i32
    %c0_i32_0 = arith.constant 0 : i32
    return %arg0, %c0_i32 : i32, i32
  }
}

</mosaic_0001>

<llo_original>
// kernel: simple_nn_forward.1
$region0: #{simple_nn_forward.1}
  #allocation0 [shape = 'u32[]', space=smem, size = 0x4, offset = 0x4, fixed_abs, tag = 'smem constant byte address 0x4 - core index']
  #allocation1 [shape = 'u32[144,128]{1,0:T(1,128)}', space=vmem, size = 0x12000, scoped, tag = 'internal scratch']
  %s0 = inlined_call_operand.vmem [shape: f32[16,784], index: 0, kind: input, shape index: {}]
  %s1 = inlined_call_operand.hbm [shape: bf16[784,128], index: 1, kind: input, shape index: {}]
  %s2 = inlined_call_operand.vmem [shape: f32[1,128], index: 2, kind: input, shape index: {}]
  %s3 = inlined_call_operand.vmem [shape: bf16[128,128], index: 3, kind: input, shape index: {}]
  %s4 = inlined_call_operand.vmem [shape: f32[1,128], index: 4, kind: input, shape index: {}]
  %s5 = inlined_call_operand.vmem [shape: bf16[16,128], index: 5, kind: output, shape index: {}]
  %s6 = sld [smem:[#allocation0]]
  $region34: #{simple_nn_forward.1} parent=0
    _
  %s8 = ssub.s32 1, %s6
  %s9 = scalar_select 0, %s8, %s6
  $region1: #{simple_nn_forward.1} parent=0
    #allocation2 [shape = 'u8[200704]{0}', space=vmem, size = 0x31000, scoped, tag = 'input window, operand 1, single buffered']
    #allocation3 [shape = 's32[1]{0}', space=sflag, size = 0x4, scoped, tag = 'scoped memory for simple_nn_forward.1']
    %10 = vsyncpa [#allocation3], 0
    // Predicated region
    $region2: #{simple_nn_forward.1} parent=1 // pred_check
      _
    $region3: #{simple_nn_forward.1} parent=1 // pred_check_branch
      %12 = sbr.rel (0) target = $region5
    $region4: #{simple_nn_forward.1} parent=1 // pred_region
      _
    $region5: #{simple_nn_forward.1} parent=1 // pred_fallthru
      _
    // Predicated region
    $region6: #{simple_nn_forward.1} parent=1 // pred_check
      _
    $region7: #{simple_nn_forward.1} parent=1 // pred_check_branch
      %14 = sbr.rel (0) target = $region9
    $region8: #{simple_nn_forward.1} parent=1 // pred_region
      %s16 = ssub.s32 6272, 6272
      %17 = vsyncadd [#allocation3], %s16
      %s18 = sshll.u32 [#allocation2], 4
      %s19 = int_to_ptr.vmem [resolvable:$true] %s18
      %24 = dma.hbm_to_vmem [thread:$0]  %s1, 6272, %s19, [#allocation3], 64, 64, 4
    $region9: #{simple_nn_forward.1} parent=1 // pred_fallthru
      _
    // Predicated region
    $region10: #{simple_nn_forward.1} parent=1 // pred_check
      _
    $region11: #{simple_nn_forward.1} parent=1 // pred_check_branch
      %26 = sbr.rel (0) target = $region13
    $region12: #{simple_nn_forward.1} parent=1 // pred_region
      _
    $region13: #{simple_nn_forward.1} parent=1 // pred_fallthru
      _
    // Predicated region
    $region14: #{simple_nn_forward.1} parent=1 // pred_check
      _
    $region15: #{simple_nn_forward.1} parent=1 // pred_check_branch
      %28 = sbr.rel (0) target = $region17
    $region16: #{simple_nn_forward.1} parent=1 // pred_region
      _
    $region17: #{simple_nn_forward.1} parent=1 // pred_fallthru
      _
    // Predicated region
    $region18: #{simple_nn_forward.1} parent=1 // pred_check
      _
    $region19: #{simple_nn_forward.1} parent=1 // pred_check_branch
      %30 = sbr.rel (0) target = $region21
    $region20: #{simple_nn_forward.1} parent=1 // pred_region
      _
    $region21: #{simple_nn_forward.1} parent=1 // pred_fallthru
      _
    // Predicated region
    $region22: #{simple_nn_forward.1} parent=1 // pred_check
      _
    $region23: #{simple_nn_forward.1} parent=1 // pred_check_branch
      %32 = sbr.rel (0) target = $region25
    $region24: #{simple_nn_forward.1} parent=1 // pred_region
      %33 = dma.done [#allocation3], 6272
    $region25: #{simple_nn_forward.1} parent=1 // pred_fallthru
      _
    %v35 = vld [vmem:[%s0] sm:$0xff]
    %v36 = vld [vmem:[%s0 + $0x8] sm:$0xff]
    %v37 = vld [vmem:[%s0 + $0x10] sm:$0xff]
    %v38 = vld [vmem:[%s0 + $0x18] sm:$0xff]
    %v39 = vld [vmem:[%s0 + $0x20] sm:$0xff]
    %v40 = vld [vmem:[%s0 + $0x28] sm:$0xff]
    %v41 = vld [vmem:[%s0 + $0x30] sm:$0xff]
    %v42 = vld [vmem:[%s0 + $0x38] sm:$0xff]
    %v43 = vld [vmem:[%s0 + $0x40] sm:$0xff]
    %v44 = vld [vmem:[%s0 + $0x48] sm:$0xff]
    %v45 = vld [vmem:[%s0 + $0x50] sm:$0xff]
    %v46 = vld [vmem:[%s0 + $0x58] sm:$0xff]
    %v47 = vld [vmem:[%s0 + $0x60] sm:$0xff]
    %v48 = vld [vmem:[%s0 + $0x68] sm:$0xff]
    %v49 = vpack.c.bf16 %v42, %v35
    %v50 = vpack.c.bf16 %v43, %v36
    %v51 = vpack.c.bf16 %v44, %v37
    %v52 = vpack.c.bf16 %v45, %v38
    %v53 = vpack.c.bf16 %v46, %v39
    %v54 = vpack.c.bf16 %v47, %v40
    %v55 = vpack.c.bf16 %v48, %v41
    %v56 = vld [vmem:[#allocation2] sm:$0xf]
    %v57 = vld [vmem:[#allocation2 + $0x4] sm:$0xf]
    %v58 = vld [vmem:[#allocation2 + $0x8] sm:$0xf]
    %v59 = vld [vmem:[#allocation2 + $0xc] sm:$0xf]
    %v60 = vld [vmem:[#allocation2 + $0x10] sm:$0xf]
    %v61 = vld [vmem:[#allocation2 + $0x14] sm:$0xf]
    %v62 = vld [vmem:[#allocation2 + $0x18] sm:$0xf]
    %v63 = vld [vmem:[#allocation2 + $0x1c] sm:$0xf]
    %v64 = vld [vmem:[#allocation2 + $0x20] sm:$0xf]
    %v65 = vld [vmem:[#allocation2 + $0x24] sm:$0xf]
    %v66 = vld [vmem:[#allocation2 + $0x28] sm:$0xf]
    %v67 = vld [vmem:[#allocation2 + $0x2c] sm:$0xf]
    %v68 = vld [vmem:[#allocation2 + $0x30] sm:$0xf]
    %v69 = vld [vmem:[#allocation2 + $0x34] sm:$0xf]
    %v70 = vld [vmem:[#allocation2 + $0x38] sm:$0xf]
    %v71 = vld [vmem:[#allocation2 + $0x3c] sm:$0xf]
    %v72 = vld [vmem:[#allocation2 + $0x40] sm:$0xf]
    %v73 = vld [vmem:[#allocation2 + $0x44] sm:$0xf]
    %v74 = vld [vmem:[#allocation2 + $0x48] sm:$0xf]
    %v75 = vld [vmem:[#allocation2 + $0x4c] sm:$0xf]
    %v76 = vld [vmem:[#allocation2 + $0x50] sm:$0xf]
    %v77 = vld [vmem:[#allocation2 + $0x54] sm:$0xf]
    %v78 = vld [vmem:[#allocation2 + $0x58] sm:$0xf]
    %v79 = vld [vmem:[#allocation2 + $0x5c] sm:$0xf]
    %v80 = vld [vmem:[#allocation2 + $0x60] sm:$0xf]
    %v81 = vld [vmem:[#allocation2 + $0x64] sm:$0xf]
    %v82 = vld [vmem:[#allocation2 + $0x68] sm:$0xf]
    %v83 = vld [vmem:[#allocation2 + $0x6c] sm:$0xf]
    %v84 = vld [vmem:[#allocation2 + $0x70] sm:$0xf]
    %v85 = vld [vmem:[#allocation2 + $0x74] sm:$0xf]
    %v86 = vld [vmem:[#allocation2 + $0x78] sm:$0xf]
    %v87 = vld [vmem:[#allocation2 + $0x7c] sm:$0xf]
    %v88 = vld [vmem:[#allocation2 + $0x80] sm:$0xf]
    %v89 = vld [vmem:[#allocation2 + $0x84] sm:$0xf]
    %v90 = vld [vmem:[#allocation2 + $0x88] sm:$0xf]
    %v91 = vld [vmem:[#allocation2 + $0x8c] sm:$0xf]
    %v92 = vld [vmem:[#allocation2 + $0x90] sm:$0xf]
    %v93 = vld [vmem:[#allocation2 + $0x94] sm:$0xf]
    %v94 = vld [vmem:[#allocation2 + $0x98] sm:$0xf]
    %v95 = vld [vmem:[#allocation2 + $0x9c] sm:$0xf]
    %v96 = vld [vmem:[#allocation2 + $0xa0] sm:$0xf]
    %v97 = vld [vmem:[#allocation2 + $0xa4] sm:$0xf]
    %v98 = vld [vmem:[#allocation2 + $0xa8] sm:$0xf]
    %v99 = vld [vmem:[#allocation2 + $0xac] sm:$0xf]
    %v100 = vld [vmem:[#allocation2 + $0xb0] sm:$0xf]
    %v101 = vld [vmem:[#allocation2 + $0xb4] sm:$0xf]
    %v102 = vld [vmem:[#allocation2 + $0xb8] sm:$0xf]
    %v103 = vld [vmem:[#allocation2 + $0xbc] sm:$0xf]
    %v104 = vld [vmem:[#allocation2 + $0xc0] sm:$0xf]
    %v105 = vld [vmem:[#allocation2 + $0xc4] sm:$0xf]
    %v106 = vld [vmem:[#allocation2 + $0xc8] sm:$0xf]
    %v107 = vld [vmem:[#allocation2 + $0xcc] sm:$0xf]
    %v108 = vld [vmem:[#allocation2 + $0xd0] sm:$0xf]
    %v109 = vld [vmem:[#allocation2 + $0xd4] sm:$0xf]
    %v110 = vld [vmem:[#allocation2 + $0xd8] sm:$0xf]
    %v111 = vld [vmem:[#allocation2 + $0xdc] sm:$0xf]
    %v112 = vld [vmem:[#allocation2 + $0xe0] sm:$0xf]
    %v113 = vld [vmem:[#allocation2 + $0xe4] sm:$0xf]
    %v114 = vld [vmem:[#allocation2 + $0xe8] sm:$0xf]
    %v115 = vld [vmem:[#allocation2 + $0xec] sm:$0xf]
    %v116 = vld [vmem:[#allocation2 + $0xf0] sm:$0xf]
    %v117 = vld [vmem:[#allocation2 + $0xf4] sm:$0xf]
    %v118 = vld [vmem:[#allocation2 + $0xf8] sm:$0xf]
    %v119 = vld [vmem:[#allocation2 + $0xfc] sm:$0xf]
    %v120 = vld [vmem:[#allocation2 + $0x100] sm:$0xf]
    %v121 = vld [vmem:[#allocation2 + $0x104] sm:$0xf]
    %v122 = vld [vmem:[#allocation2 + $0x108] sm:$0xf]
    %v123 = vld [vmem:[#allocation2 + $0x10c] sm:$0xf]
    %v124 = vld [vmem:[#allocation2 + $0x110] sm:$0xf]
    %v125 = vld [vmem:[#allocation2 + $0x114] sm:$0xf]
    %v126 = vld [vmem:[#allocation2 + $0x118] sm:$0xf]
    %v127 = vld [vmem:[#allocation2 + $0x11c] sm:$0xf]
    %v128 = vld [vmem:[#allocation2 + $0x120] sm:$0xf]
    %v129 = vld [vmem:[#allocation2 + $0x124] sm:$0xf]
    %v130 = vld [vmem:[#allocation2 + $0x128] sm:$0xf]
    %v131 = vld [vmem:[#allocation2 + $0x12c] sm:$0xf]
    %v132 = vld [vmem:[#allocation2 + $0x130] sm:$0xf]
    %v133 = vld [vmem:[#allocation2 + $0x134] sm:$0xf]
    %v134 = vld [vmem:[#allocation2 + $0x138] sm:$0xf]
    %v135 = vld [vmem:[#allocation2 + $0x13c] sm:$0xf]
    %v136 = vld [vmem:[#allocation2 + $0x140] sm:$0xf]
    %v137 = vld [vmem:[#allocation2 + $0x144] sm:$0xf]
    %v138 = vld [vmem:[#allocation2 + $0x148] sm:$0xf]
    %v139 = vld [vmem:[#allocation2 + $0x14c] sm:$0xf]
    %v140 = vld [vmem:[#allocation2 + $0x150] sm:$0xf]
    %v141 = vld [vmem:[#allocation2 + $0x154] sm:$0xf]
    %v142 = vld [vmem:[#allocation2 + $0x158] sm:$0xf]
    %v143 = vld [vmem:[#allocation2 + $0x15c] sm:$0xf]
    %v144 = vld [vmem:[#allocation2 + $0x160] sm:$0xf]
    %v145 = vld [vmem:[#allocation2 + $0x164] sm:$0xf]
    %v146 = vld [vmem:[#allocation2 + $0x168] sm:$0xf]
    %v147 = vld [vmem:[#allocation2 + $0x16c] sm:$0xf]
    %v148 = vld [vmem:[#allocation2 + $0x170] sm:$0xf]
    %v149 = vld [vmem:[#allocation2 + $0x174] sm:$0xf]
    %v150 = vld [vmem:[#allocation2 + $0x178] sm:$0xf]
    %v151 = vld [vmem:[#allocation2 + $0x17c] sm:$0xf]
    %v152 = vld [vmem:[#allocation2 + $0x180] sm:$0xf]
    %v153 = vld [vmem:[#allocation2 + $0x184] sm:$0xf]
    %v154 = vld [vmem:[%s2] sm:$0x1]
    %v156 = vlaneseq
    %v157 = vshrl.u32 %v156, 7
    %v158 = vsub.s32 0, %v157
    %v159 = vrot.slane %v154, %v158
    %v259 = vunpack.c.l.b16 %v56
    %v260 = vunpack.c.l.b16 %v57
    %v261 = vunpack.c.l.b16 %v58
    %v262 = vunpack.c.l.b16 %v59
    %v263 = vunpack.c.l.b16 %v60
    %v264 = vunpack.c.l.b16 %v61
    %v265 = vunpack.c.l.b16 %v62
    %v266 = vunpack.c.l.b16 %v63
    %v267 = vunpack.c.l.b16 %v64
    %v268 = vunpack.c.l.b16 %v65
    %v269 = vunpack.c.l.b16 %v66
    %v270 = vunpack.c.l.b16 %v67
    %v271 = vunpack.c.l.b16 %v68
    %v272 = vunpack.c.l.b16 %v69
    %v273 = vunpack.c.l.b16 %v70
    %v274 = vunpack.c.l.b16 %v71
    %v275 = vunpack.c.l.b16 %v72
    %v276 = vunpack.c.l.b16 %v73
    %v277 = vunpack.c.l.b16 %v74
    %v278 = vunpack.c.l.b16 %v75
    %v279 = vunpack.c.l.b16 %v76
    %v280 = vunpack.c.l.b16 %v77
    %v281 = vunpack.c.l.b16 %v78
    %v282 = vunpack.c.l.b16 %v79
    %v283 = vunpack.c.l.b16 %v80
    %v284 = vunpack.c.l.b16 %v81
    %v285 = vunpack.c.l.b16 %v82
    %v286 = vunpack.c.l.b16 %v83
    %v287 = vunpack.c.l.b16 %v84
    %v288 = vunpack.c.l.b16 %v85
    %v289 = vunpack.c.l.b16 %v86
    %v290 = vunpack.c.l.b16 %v87
    %v291 = vunpack.c.l.b16 %v88
    %v292 = vunpack.c.l.b16 %v89
    %v293 = vunpack.c.l.b16 %v90
    %v294 = vunpack.c.l.b16 %v91
    %v295 = vunpack.c.l.b16 %v92
    %v296 = vunpack.c.l.b16 %v93
    %v297 = vunpack.c.l.b16 %v94
    %v298 = vunpack.c.l.b16 %v95
    %v299 = vunpack.c.l.b16 %v96
    %v300 = vunpack.c.l.b16 %v97
    %v301 = vunpack.c.l.b16 %v98
    %v302 = vunpack.c.l.b16 %v99
    %v303 = vunpack.c.l.b16 %v100
    %v304 = vunpack.c.l.b16 %v101
    %v305 = vunpack.c.l.b16 %v102
    %v306 = vunpack.c.l.b16 %v103
    %v307 = vunpack.c.l.b16 %v104
    %v308 = vunpack.c.l.b16 %v105
    %v309 = vunpack.c.l.b16 %v106
    %v310 = vunpack.c.l.b16 %v107
    %v311 = vunpack.c.l.b16 %v108
    %v312 = vunpack.c.l.b16 %v109
    %v313 = vunpack.c.l.b16 %v110
    %v314 = vunpack.c.l.b16 %v111
    %v315 = vunpack.c.l.b16 %v112
    %v316 = vunpack.c.l.b16 %v113
    %v317 = vunpack.c.l.b16 %v114
    %v318 = vunpack.c.l.b16 %v115
    %v319 = vunpack.c.l.b16 %v116
    %v320 = vunpack.c.l.b16 %v117
    %v321 = vunpack.c.l.b16 %v118
    %v322 = vunpack.c.l.b16 %v119
    %v323 = vunpack.c.l.b16 %v120
    %v324 = vunpack.c.l.b16 %v121
    %v325 = vunpack.c.l.b16 %v122
    %v326 = vunpack.c.l.b16 %v123
    %v327 = vunpack.c.l.b16 %v124
    %v328 = vunpack.c.l.b16 %v125
    %v329 = vunpack.c.l.b16 %v126
    %v330 = vunpack.c.l.b16 %v127
    %v331 = vunpack.c.l.b16 %v128
    %v332 = vunpack.c.l.b16 %v129
    %v333 = vunpack.c.l.b16 %v130
    %v334 = vunpack.c.l.b16 %v131
    %v335 = vunpack.c.l.b16 %v132
    %v336 = vunpack.c.l.b16 %v133
    %v337 = vunpack.c.l.b16 %v134
    %v338 = vunpack.c.l.b16 %v135
    %v339 = vunpack.c.l.b16 %v136
    %v340 = vunpack.c.l.b16 %v137
    %v341 = vunpack.c.l.b16 %v138
    %v342 = vunpack.c.l.b16 %v139
    %v343 = vunpack.c.l.b16 %v140
    %v344 = vunpack.c.l.b16 %v141
    %v345 = vunpack.c.l.b16 %v142
    %v346 = vunpack.c.l.b16 %v143
    %v347 = vunpack.c.l.b16 %v144
    %v348 = vunpack.c.l.b16 %v145
    %v349 = vunpack.c.l.b16 %v146
    %v350 = vunpack.c.l.b16 %v147
    %v351 = vunpack.c.l.b16 %v148
    %v352 = vunpack.c.l.b16 %v149
    %v353 = vunpack.c.l.b16 %v150
    %v354 = vunpack.c.l.b16 %v151
    %v355 = vunpack.c.l.b16 %v152
    %v356 = vunpack.c.l.b16 %v153
    %v357 = vpack.c.b16 %v260, %v259
    %v358 = vpack.c.b16 %v262, %v261
    %v359 = vpack.c.b16 %v264, %v263
    %v360 = vpack.c.b16 %v266, %v265
    %v361 = vpack.c.b16 %v268, %v267
    %v362 = vpack.c.b16 %v270, %v269
    %v363 = vpack.c.b16 %v272, %v271
    %v364 = vpack.c.b16 %v274, %v273
    %v365 = vpack.c.b16 %v276, %v275
    %v366 = vpack.c.b16 %v278, %v277
    %v367 = vpack.c.b16 %v280, %v279
    %v368 = vpack.c.b16 %v282, %v281
    %v369 = vpack.c.b16 %v284, %v283
    %v370 = vpack.c.b16 %v286, %v285
    %v371 = vpack.c.b16 %v288, %v287
    %v372 = vpack.c.b16 %v290, %v289
    %v373 = vpack.c.b16 %v292, %v291
    %v374 = vpack.c.b16 %v294, %v293
    %v375 = vpack.c.b16 %v296, %v295
    %v376 = vpack.c.b16 %v298, %v297
    %v377 = vpack.c.b16 %v300, %v299
    %v378 = vpack.c.b16 %v302, %v301
    %v379 = vpack.c.b16 %v304, %v303
    %v380 = vpack.c.b16 %v306, %v305
    %v381 = vpack.c.b16 %v308, %v307
    %v382 = vpack.c.b16 %v310, %v309
    %v383 = vpack.c.b16 %v312, %v311
    %v384 = vpack.c.b16 %v314, %v313
    %v385 = vpack.c.b16 %v316, %v315
    %v386 = vpack.c.b16 %v318, %v317
    %v387 = vpack.c.b16 %v320, %v319
    %v388 = vpack.c.b16 %v322, %v321
    %v389 = vpack.c.b16 %v324, %v323
    %v390 = vpack.c.b16 %v326, %v325
    %v391 = vpack.c.b16 %v328, %v327
    %v392 = vpack.c.b16 %v330, %v329
    %v393 = vpack.c.b16 %v332, %v331
    %v394 = vpack.c.b16 %v334, %v333
    %v395 = vpack.c.b16 %v336, %v335
    %v396 = vpack.c.b16 %v338, %v337
    %v397 = vpack.c.b16 %v340, %v339
    %v398 = vpack.c.b16 %v342, %v341
    %v399 = vpack.c.b16 %v344, %v343
    %v400 = vpack.c.b16 %v346, %v345
    %v401 = vpack.c.b16 %v348, %v347
    %v402 = vpack.c.b16 %v350, %v349
    %v403 = vpack.c.b16 %v352, %v351
    %v404 = vpack.c.b16 %v354, %v353
    %v405 = vpack.c.b16 %v356, %v355
    %vm455 = vcmask 130048
    %v457 = vsel %vm455, %v55, 0
    %459 = vmatprep.subr.bf16.mxu0 0
    %460 = vmatpush1.bf16.msra.mxu0 %v357
    %461 = vmatprep.subr.bf16.mxu0 0
    %462 = vmatpush1.bf16.msra.mxu0 %v358
    %463 = vmatprep.subr.bf16.mxu0 0
    %464 = vmatpush1.bf16.msra.mxu0 %v359
    %465 = vmatprep.subr.bf16.mxu0 0
    %466 = vmatpush1.bf16.msra.mxu0 %v360
    %467 = vmatprep.subr.bf16.mxu0 0
    %468 = vmatpush1.bf16.msra.mxu0 %v361
    %469 = vmatprep.subr.bf16.mxu0 0
    %470 = vmatpush1.bf16.msra.mxu0 %v362
    %471 = vmatprep.subr.bf16.mxu0 0
    %472 = vmatpush1.bf16.msra.mxu0 %v363
    %473 = vmatprep.subr.bf16.mxu0 0
    %474 = vmatpush1.bf16.msra.mxu0 %v364
    %475 = vmatprep.subr.bf16.mxu0 0
    %476 = vmatpush1.bf16.msra.mxu0 %v365
    %477 = vmatprep.subr.bf16.mxu0 0
    %478 = vmatpush1.bf16.msra.mxu0 %v366
    %479 = vmatprep.subr.bf16.mxu0 0
    %480 = vmatpush1.bf16.msra.mxu0 %v367
    %481 = vmatprep.subr.bf16.mxu0 0
    %482 = vmatpush1.bf16.msra.mxu0 %v368
    %483 = vmatprep.subr.bf16.mxu0 0
    %484 = vmatpush1.bf16.msra.mxu0 %v369
    %485 = vmatprep.subr.bf16.mxu0 0
    %486 = vmatpush1.bf16.msra.mxu0 %v370
    %487 = vmatprep.subr.bf16.mxu0 0
    %488 = vmatpush1.bf16.msra.mxu0 %v371
    %489 = vmatprep.subr.bf16.mxu0 0
    %490 = vmatpush1.bf16.msra.mxu0 %v372
    %491 = vmatprep.mubr.bf16.mxu0 %v50
    %492 = vmatmul.mubr.bf16.gmra.mrb[0].mxu0 %v49
    %v493 = vpop.f32.mrb[0].mxu0
    %v494 = vadd.f32 %v159, %v493
    %v495 = vpop.f32.mrb[0].mxu0
    %v496 = vpop.f32.mrb[0].mxu0
    %v497 = vadd.f32 %v159, %v496
    %v498 = vpop.f32.mrb[0].mxu0
    %499 = vdwg.mxu0
    %500 = vmatprep.subr.bf16.mxu0 0
    %501 = vmatpush1.bf16.msra.mxu0 %v373
    %502 = vmatprep.subr.bf16.mxu0 0
    %503 = vmatpush1.bf16.msra.mxu0 %v374
    %504 = vmatprep.subr.bf16.mxu0 0
    %505 = vmatpush1.bf16.msra.mxu0 %v375
    %506 = vmatprep.subr.bf16.mxu0 0
    %507 = vmatpush1.bf16.msra.mxu0 %v376
    %508 = vmatprep.subr.bf16.mxu0 0
    %509 = vmatpush1.bf16.msra.mxu0 %v377
    %510 = vmatprep.subr.bf16.mxu0 0
    %511 = vmatpush1.bf16.msra.mxu0 %v378
    %512 = vmatprep.subr.bf16.mxu0 0
    %513 = vmatpush1.bf16.msra.mxu0 %v379
    %514 = vmatprep.subr.bf16.mxu0 0
    %515 = vmatpush1.bf16.msra.mxu0 %v380
    %516 = vmatprep.subr.bf16.mxu0 0
    %517 = vmatpush1.bf16.msra.mxu0 %v381
    %518 = vmatprep.subr.bf16.mxu0 0
    %519 = vmatpush1.bf16.msra.mxu0 %v382
    %520 = vmatprep.subr.bf16.mxu0 0
    %521 = vmatpush1.bf16.msra.mxu0 %v383
    %522 = vmatprep.subr.bf16.mxu0 0
    %523 = vmatpush1.bf16.msra.mxu0 %v384
    %524 = vmatprep.subr.bf16.mxu0 0
    %525 = vmatpush1.bf16.msra.mxu0 %v385
    %526 = vmatprep.subr.bf16.mxu0 0
    %527 = vmatpush1.bf16.msra.mxu0 %v386
    %528 = vmatprep.subr.bf16.mxu0 0
    %529 = vmatpush1.bf16.msra.mxu0 %v387
    %530 = vmatprep.subr.bf16.mxu0 0
    %531 = vmatpush1.bf16.msra.mxu0 %v388
    %532 = vmatprep.mubr.bf16.mxu0 %v52
    %533 = vmatmul.mubr.bf16.gmra.mrb[0].mxu0 %v51
    %v534 = vpop.f32.mrb[0].mxu0
    %v535 = vadd.f32 %v494, %v534
    %v536 = vpop.f32.mrb[0].mxu0
    %v537 = vpop.f32.mrb[0].mxu0
    %v538 = vadd.f32 %v497, %v537
    %v539 = vpop.f32.mrb[0].mxu0
    %540 = vdwg.mxu0
    %541 = vmatprep.subr.bf16.mxu0 0
    %542 = vmatpush1.bf16.msra.mxu0 %v389
    %543 = vmatprep.subr.bf16.mxu0 0
    %544 = vmatpush1.bf16.msra.mxu0 %v390
    %545 = vmatprep.subr.bf16.mxu0 0
    %546 = vmatpush1.bf16.msra.mxu0 %v391
    %547 = vmatprep.subr.bf16.mxu0 0
    %548 = vmatpush1.bf16.msra.mxu0 %v392
    %549 = vmatprep.subr.bf16.mxu0 0
    %550 = vmatpush1.bf16.msra.mxu0 %v393
    %551 = vmatprep.subr.bf16.mxu0 0
    %552 = vmatpush1.bf16.msra.mxu0 %v394
    %553 = vmatprep.subr.bf16.mxu0 0
    %554 = vmatpush1.bf16.msra.mxu0 %v395
    %555 = vmatprep.subr.bf16.mxu0 0
    %556 = vmatpush1.bf16.msra.mxu0 %v396
    %557 = vmatprep.subr.bf16.mxu0 0
    %558 = vmatpush1.bf16.msra.mxu0 %v397
    %559 = vmatprep.subr.bf16.mxu0 0
    %560 = vmatpush1.bf16.msra.mxu0 %v398
    %561 = vmatprep.subr.bf16.mxu0 0
    %562 = vmatpush1.bf16.msra.mxu0 %v399
    %563 = vmatprep.subr.bf16.mxu0 0
    %564 = vmatpush1.bf16.msra.mxu0 %v400
    %565 = vmatprep.subr.bf16.mxu0 0
    %566 = vmatpush1.bf16.msra.mxu0 %v401
    %567 = vmatprep.subr.bf16.mxu0 0
    %568 = vmatpush1.bf16.msra.mxu0 %v402
    %569 = vmatprep.subr.bf16.mxu0 0
    %570 = vmatpush1.bf16.msra.mxu0 %v403
    %571 = vmatprep.subr.bf16.mxu0 0
    %572 = vmatpush1.bf16.msra.mxu0 %v404
    %573 = vmatprep.mubr.bf16.mxu0 %v54
    %574 = vmatmul.mubr.bf16.gmra.mrb[0].mxu0 %v53
    %v575 = vpop.f32.mrb[0].mxu0
    %v576 = vadd.f32 %v535, %v575
    %v577 = vpop.f32.mrb[0].mxu0
    %v578 = vpop.f32.mrb[0].mxu0
    %v579 = vadd.f32 %v538, %v578
    %v580 = vpop.f32.mrb[0].mxu0
    %581 = vdwg.mxu0
    %582 = vmatprep.subr.bf16.mxu0 0
    %583 = vmatpush1.bf16.msra.mxu0 %v405
    %584 = vmatprep.subr.bf16.mxu0 0
    %585 = vmatpush1.bf16.msra.mxu0 0
    %586 = vmatprep.subr.bf16.mxu0 0
    %587 = vmatpush1.bf16.msra.mxu0 0
    %588 = vmatprep.subr.bf16.mxu0 0
    %589 = vmatpush1.bf16.msra.mxu0 0
    %590 = vmatprep.subr.bf16.mxu0 0
    %591 = vmatpush1.bf16.msra.mxu0 0
    %592 = vmatprep.subr.bf16.mxu0 0
    %593 = vmatpush1.bf16.msra.mxu0 0
    %594 = vmatprep.subr.bf16.mxu0 0
    %595 = vmatpush1.bf16.msra.mxu0 0
    %596 = vmatprep.subr.bf16.mxu0 0
    %597 = vmatpush1.bf16.msra.mxu0 0
    %598 = vmatprep.subr.bf16.mxu0 0
    %599 = vmatpush1.bf16.msra.mxu0 0
    %600 = vmatprep.subr.bf16.mxu0 0
    %601 = vmatpush1.bf16.msra.mxu0 0
    %602 = vmatprep.subr.bf16.mxu0 0
    %603 = vmatpush1.bf16.msra.mxu0 0
    %604 = vmatprep.subr.bf16.mxu0 0
    %605 = vmatpush1.bf16.msra.mxu0 0
    %606 = vmatprep.subr.bf16.mxu0 0
    %607 = vmatpush1.bf16.msra.mxu0 0
    %608 = vmatprep.subr.bf16.mxu0 0
    %609 = vmatpush1.bf16.msra.mxu0 0
    %610 = vmatprep.subr.bf16.mxu0 0
    %611 = vmatpush1.bf16.msra.mxu0 0
    %612 = vmatprep.subr.bf16.mxu0 0
    %613 = vmatpush1.bf16.msra.mxu0 0
    %614 = vmatprep.mubr.bf16.mxu0 0
    %615 = vmatmul.mubr.bf16.gmra.mrb[0].mxu0 %v457
    %v616 = vpop.f32.mrb[0].mxu0
    %v617 = vadd.f32 %v576, %v616
    %v618 = vpop.f32.mrb[0].mxu0
    %v619 = vpop.f32.mrb[0].mxu0
    %v620 = vadd.f32 %v579, %v619
    %v621 = vpop.f32.mrb[0].mxu0
    %622 = vdwg.mxu0
    %v623 = vmax.f32 %v617, 0.0
    %v624 = vmax.f32 %v620, 0.0
    %v625 = vpack.c.bf16 %v624, %v623
    %v626 = vld [vmem:[%s3] sm:$0xf]
    %v627 = vld [vmem:[%s3 + $0x4] sm:$0xf]
    %v628 = vld [vmem:[%s3 + $0x8] sm:$0xf]
    %v629 = vld [vmem:[%s3 + $0xc] sm:$0xf]
    %v630 = vld [vmem:[%s3 + $0x10] sm:$0xf]
    %v631 = vld [vmem:[%s3 + $0x14] sm:$0xf]
    %v632 = vld [vmem:[%s3 + $0x18] sm:$0xf]
    %v633 = vld [vmem:[%s3 + $0x1c] sm:$0xf]
    %v634 = vld [vmem:[%s3 + $0x20] sm:$0xf]
    %v635 = vld [vmem:[%s3 + $0x24] sm:$0xf]
    %v636 = vld [vmem:[%s3 + $0x28] sm:$0xf]
    %v637 = vld [vmem:[%s3 + $0x2c] sm:$0xf]
    %v638 = vld [vmem:[%s3 + $0x30] sm:$0xf]
    %v639 = vld [vmem:[%s3 + $0x34] sm:$0xf]
    %v640 = vld [vmem:[%s3 + $0x38] sm:$0xf]
    %v641 = vld [vmem:[%s3 + $0x3c] sm:$0xf]
    %v642 = vld [vmem:[%s4] sm:$0x1]
    %v644 = vlaneseq
    %v645 = vshrl.u32 %v644, 7
    %v646 = vsub.s32 0, %v645
    %v647 = vrot.slane %v642, %v646
    %v665 = vunpack.c.l.b16 %v626
    %v666 = vunpack.c.l.b16 %v627
    %v667 = vunpack.c.l.b16 %v628
    %v668 = vunpack.c.l.b16 %v629
    %v669 = vunpack.c.l.b16 %v630
    %v670 = vunpack.c.l.b16 %v631
    %v671 = vunpack.c.l.b16 %v632
    %v672 = vunpack.c.l.b16 %v633
    %v673 = vunpack.c.l.b16 %v634
    %v674 = vunpack.c.l.b16 %v635
    %v675 = vunpack.c.l.b16 %v636
    %v676 = vunpack.c.l.b16 %v637
    %v677 = vunpack.c.l.b16 %v638
    %v678 = vunpack.c.l.b16 %v639
    %v679 = vunpack.c.l.b16 %v640
    %v680 = vunpack.c.l.b16 %v641
    %v681 = vpack.c.b16 %v666, %v665
    %v682 = vpack.c.b16 %v668, %v667
    %v683 = vpack.c.b16 %v670, %v669
    %v684 = vpack.c.b16 %v672, %v671
    %v685 = vpack.c.b16 %v674, %v673
    %v686 = vpack.c.b16 %v676, %v675
    %v687 = vpack.c.b16 %v678, %v677
    %v688 = vpack.c.b16 %v680, %v679
    %697 = vmatprep.subr.bf16.mxu0 0
    %698 = vmatpush1.bf16.msra.mxu0 %v681
    %699 = vmatprep.subr.bf16.mxu0 0
    %700 = vmatpush1.bf16.msra.mxu0 %v682
    %701 = vmatprep.subr.bf16.mxu0 0
    %702 = vmatpush1.bf16.msra.mxu0 %v683
    %703 = vmatprep.subr.bf16.mxu0 0
    %704 = vmatpush1.bf16.msra.mxu0 %v684
    %705 = vmatprep.subr.bf16.mxu0 0
    %706 = vmatpush1.bf16.msra.mxu0 %v685
    %707 = vmatprep.subr.bf16.mxu0 0
    %708 = vmatpush1.bf16.msra.mxu0 %v686
    %709 = vmatprep.subr.bf16.mxu0 0
    %710 = vmatpush1.bf16.msra.mxu0 %v687
    %711 = vmatprep.subr.bf16.mxu0 0
    %712 = vmatpush1.bf16.msra.mxu0 %v688
    %713 = vmatprep.subr.bf16.mxu0 0
    %714 = vmatpush1.bf16.msra.mxu0 0
    %715 = vmatprep.subr.bf16.mxu0 0
    %716 = vmatpush1.bf16.msra.mxu0 0
    %717 = vmatprep.subr.bf16.mxu0 0
    %718 = vmatpush1.bf16.msra.mxu0 0
    %719 = vmatprep.subr.bf16.mxu0 0
    %720 = vmatpush1.bf16.msra.mxu0 0
    %721 = vmatprep.subr.bf16.mxu0 0
    %722 = vmatpush1.bf16.msra.mxu0 0
    %723 = vmatprep.subr.bf16.mxu0 0
    %724 = vmatpush1.bf16.msra.mxu0 0
    %725 = vmatprep.subr.bf16.mxu0 0
    %726 = vmatpush1.bf16.msra.mxu0 0
    %727 = vmatprep.subr.bf16.mxu0 0
    %728 = vmatpush1.bf16.msra.mxu0 0
    %729 = vmatprep.mubr.bf16.mxu0 0
    %730 = vmatmul.mubr.bf16.gmra.mrb[0].mxu0 %v625
    %v731 = vpop.f32.mrb[0].mxu0
    %v732 = vadd.f32 %v647, %v731
    %v733 = vpop.f32.mrb[0].mxu0
    %v734 = vpop.f32.mrb[0].mxu0
    %v735 = vadd.f32 %v647, %v734
    %v736 = vpop.f32.mrb[0].mxu0
    %737 = vdwg.mxu0
    %v738 = vpack.c.bf16 %v735, %v732
    %v740 = vunpack.c.l.b16 %v738
    %v741 = vunpack.c.h.b16 %v738
    %v742 = vpack.c.b16 %v740, %v740
    %v743 = vpack.c.b16 %v741, %v741
    %746 = vst [vmem:[%s5] sm:$0xf] %v742
    %747 = vst [vmem:[%s5 + $0x4] sm:$0xf] %v743
    // Predicated region
    $region26: #{simple_nn_forward.1} parent=1 // pred_check
      _
    $region27: #{simple_nn_forward.1} parent=1 // pred_check_branch
      %749 = sbr.rel (0) target = $region29
    $region28: #{simple_nn_forward.1} parent=1 // pred_region
      _
    $region29: #{simple_nn_forward.1} parent=1 // pred_fallthru
      _
    // Predicated region
    $region30: #{simple_nn_forward.1} parent=1 // pred_check
      _
    $region31: #{simple_nn_forward.1} parent=1 // pred_check_branch
      %751 = sbr.rel (0) target = $region33
    $region32: #{simple_nn_forward.1} parent=1 // pred_region
      _
    $region33: #{simple_nn_forward.1} parent=1 // pred_fallthru
      _
    %752 = vsyncpa [#allocation3], 1

</llo_original>
